<compile_context>
chip_gen: v5e
topology: v5e:2x2
jax: 0.10.0
libtpu: 0.0.40
codegen_flags: <defaults>
</compile_context>

<pallas_src>
import jax
import jax.numpy as jnp
from jax.experimental import pallas as pl
from jax.experimental.pallas import tpu as pltpu

EPS = 1e-5


def _round_up(a, m):
    return (a + m - 1) // m * m


def _prenorm_kernel(x_ref, gamma_ref, beta_ref, w_ref, b_ref, o_ref):
    # x_ref:     (TR, D)  row tile of the flattened (rows, D) activation slab
    # gamma_ref: (1, D)   f32
    # beta_ref:  (1, D)   f32
    # w_ref:     (D, D)   matmul operand dtype (== x.dtype)
    # b_ref:     (1, D)   f32
    # o_ref:     (TR, D)  x.dtype
    x = x_ref[...].astype(jnp.float32)

    # --- LayerNorm statistics (biased variance, f32), per row ---
    mean = jnp.mean(x, axis=-1, keepdims=True)
    xc = x - mean
    var = jnp.mean(xc * xc, axis=-1, keepdims=True)
    ln = xc * jax.lax.rsqrt(var + EPS) * gamma_ref[...] + beta_ref[...]

    # --- fn: Linear(D, D) on the MXU, f32 accumulation ---
    y = jnp.dot(ln.astype(w_ref.dtype), w_ref[...],
                preferred_element_type=jnp.float32)
    o_ref[...] = (y + b_ref[...]).astype(o_ref.dtype)


def _vmem_limit_bytes():
    limit = 48 * 1024 * 1024
    try:
        cap = int(pltpu.get_tpu_info().vmem_capacity_bytes)
        limit = min(limit, (cap * 3) // 4)
    except Exception:
        pass
    return limit


def _derive_row_tile(rows, d, x_dtype, w_dtype, vmem_budget):
    xb = jnp.dtype(x_dtype).itemsize
    wb = jnp.dtype(w_dtype).itemsize
    mult = 8 if xb >= 4 else 16                     # sublane alignment (packed dtypes)
    # Double-buffered in/out tiles + ~6 f32-equivalent temporaries per element.
    per_row = d * (2 * xb + 2 * xb + 6 * 4)
    # Double-buffered resident W + gamma/beta/b.
    resident = 2 * d * d * wb + 4 * d * 4
    tr = max((vmem_budget - resident) // per_row, mult)
    tr = max((tr // mult) * mult, mult)
    # At least 2 roughly balanced row tiles -> both v7x TensorCores get work.
    tr = min(tr, _round_up(pl.cdiv(rows, 2), mult))
    return int(max(tr, mult))


def prenorm_forward(x, gamma, beta, w, b, *, row_tile=None):
    """PreNorm forward: fn(LayerNorm(x)) with fn = Linear(D, D) given by (w, b).

    x: (..., D). Returns an array of the same shape and dtype as x.
    """
    *lead, D = x.shape
    rows = 1
    for s in lead:
        rows *= s
    x2 = x.reshape(rows, D)                      # free: collapses leading dims

    op_dtype = x.dtype                           # MXU operand dtype follows x
    w_op = w.astype(op_dtype)
    gamma2 = gamma.astype(jnp.float32).reshape(1, D)
    beta2 = beta.astype(jnp.float32).reshape(1, D)
    b2 = b.astype(jnp.float32).reshape(1, D)

    vmem_limit = _vmem_limit_bytes()
    if row_tile is None:
        TR = _derive_row_tile(rows, D, x.dtype, op_dtype, (vmem_limit * 3) // 5)
    else:
        mult = 8 if jnp.dtype(x.dtype).itemsize >= 4 else 16
        TR = _round_up(int(row_tile), mult)

    grid = (pl.cdiv(rows, TR),)                  # ragged last block: writes masked by Pallas

    xb = jnp.dtype(x.dtype).itemsize
    cost = pl.CostEstimate(
        flops=2 * rows * D * D,
        transcendentals=rows,                    # one rsqrt per row
        bytes_accessed=rows * D * 2 * xb
        + D * D * jnp.dtype(op_dtype).itemsize
        + 3 * D * 4,
    )

    # NOTE: W/gamma/beta/b have constant index maps -> DMAed once and kept
    # VMEM-resident (single-buffering them via pipeline_mode=pl.Buffered(1)
    # would save another D*D*itemsize of VMEM; omitted to keep lowering simple).
    out = pl.pallas_call(
        _prenorm_kernel,
        out_shape=jax.ShapeDtypeStruct((rows, D), x.dtype),
        grid_spec=pltpu.PrefetchScalarGridSpec(
            num_scalar_prefetch=0,
            grid=grid,
            in_specs=[
                pl.BlockSpec((TR, D), lambda i: (i, 0)),   # x: row-tiled
                pl.BlockSpec((1, D), lambda i: (0, 0)),    # gamma: resident
                pl.BlockSpec((1, D), lambda i: (0, 0)),    # beta:  resident
                pl.BlockSpec((D, D), lambda i: (0, 0)),    # W:     resident
                pl.BlockSpec((1, D), lambda i: (0, 0)),    # b:     resident
            ],
            out_specs=pl.BlockSpec((TR, D), lambda i: (i, 0)),
        ),
        compiler_params=pltpu.CompilerParams(
            dimension_semantics=("parallel",),   # independent row tiles
            vmem_limit_bytes=vmem_limit,
        ),
        cost_estimate=cost,
    )(x2, gamma2, beta2, w_op, b2)

    return out.reshape(x.shape)


def prenorm_reference(x, gamma, beta, w, b):
    xf = x.astype(jnp.float32)
    mean = jnp.mean(xf, axis=-1, keepdims=True)
    var = jnp.mean((xf - mean) ** 2, axis=-1, keepdims=True)
    ln = (xf - mean) * jax.lax.rsqrt(var + EPS) * gamma.astype(jnp.float32) \
        + beta.astype(jnp.float32)
    y = ln @ w.astype(jnp.float32) + b.astype(jnp.float32)
    return y.astype(x.dtype)


if __name__ == "__main__":
    key = jax.random.PRNGKey(0)
    kx, kw, kb = jax.random.split(key, 3)

    B, S, D = 2, 8, 32
    gamma = jnp.ones((D,), jnp.float32)          # nn.LayerNorm default init
    beta = jnp.zeros((D,), jnp.float32)
    w = jax.random.normal(kw, (D, D), jnp.float32) * (1.0 / D ** 0.5)
    b = jax.random.normal(kb, (D,), jnp.float32) * 0.01

    # 1) f32 activations, rows divisible by the row tile.
    x = jax.random.normal(kx, (B, S, D), jnp.float32)
    y = prenorm_forward(x, gamma, beta, w, b)
    jax.block_until_ready(y)
    assert y.shape == x.shape and y.dtype == x.dtype
    assert jnp.allclose(y, prenorm_reference(x, gamma, beta, w, b),
                        atol=2e-2, rtol=2e-2), "f32 mismatch vs reference"

    # 2) ragged row count (rows % TR != 0) -> exercises the masked last block.
    x_r = x[:, :7, :]
    y_r = prenorm_forward(x_r, gamma, beta, w, b)
    jax.block_until_ready(y_r)
    assert jnp.allclose(y_r, prenorm_reference(x_r, gamma, beta, w, b),
                        atol=2e-2, rtol=2e-2), "ragged mismatch vs reference"

    # 3) bf16 activations end-to-end (bf16 I/O + bf16 MXU operands, f32 stats).
    x_bf = x.astype(jnp.bfloat16)
    y_bf = prenorm_forward(x_bf, gamma, beta, w, b)
    jax.block_until_ready(y_bf)
    assert y_bf.dtype == jnp.bfloat16
    assert jnp.allclose(y_bf.astype(jnp.float32),
                        prenorm_reference(x_bf, gamma, beta, w, b).astype(jnp.float32),
                        atol=1e-1, rtol=1e-1), "bf16 mismatch vs reference"

    print("KERNEL_OK")
</pallas_src>

<mosaic_0001>
module attributes {stable_mosaic.version = 11 : i64} {
  func.func @_prenorm_kernel(%arg0: i32, %arg1: memref<8x32xf32, #tpu.memory_space<vmem>>, %arg2: memref<1x32xf32, #tpu.memory_space<vmem>>, %arg3: memref<1x32xf32, #tpu.memory_space<vmem>>, %arg4: memref<32x32xf32, #tpu.memory_space<vmem>>, %arg5: memref<1x32xf32, #tpu.memory_space<vmem>>, %arg6: memref<8x32xf32, #tpu.memory_space<vmem>>) attributes {dimension_semantics = [#tpu.dimension_semantics<parallel>], iteration_bounds = array<i64: 2>, scalar_prefetch = 0 : i64, scratch_operands = 0 : i64, tpu.core_type = #tpu.core_type<tc>, window_params = [{transform_indices = @transform_0, window_bounds = array<i64: 8, 32>}, {pipeline_mode = #tpu.pipeline_mode<synchronous>, transform_indices = @transform_1, window_bounds = array<i64: 1, 32>}, {pipeline_mode = #tpu.pipeline_mode<synchronous>, transform_indices = @transform_2, window_bounds = array<i64: 1, 32>}, {pipeline_mode = #tpu.pipeline_mode<synchronous>, transform_indices = @transform_3, window_bounds = array<i64: 32, 32>}, {pipeline_mode = #tpu.pipeline_mode<synchronous>, transform_indices = @transform_4, window_bounds = array<i64: 1, 32>}, {transform_indices = @transform_5, window_bounds = array<i64: 8, 32>}]} {
    %c0 = arith.constant 0 : index
    %c0_0 = arith.constant 0 : index
    %0 = vector.load %arg1[%c0, %c0_0] : memref<8x32xf32, #tpu.memory_space<vmem>>, vector<8x32xf32>
    %cst = arith.constant dense<0.000000e+00> : vector<8xf32>
    %1 = vector.multi_reduction <add>, %0, %cst [1] : vector<8x32xf32> to vector<8xf32>
    %2 = vector.shape_cast %1 : vector<8xf32> to vector<8x1xf32>
    %cst_1 = arith.constant 3.200000e+01 : f32
    %3 = vector.broadcast %cst_1 : f32 to vector<8x1xf32>
    %4 = arith.divf %2, %3 : vector<8x1xf32>
    %5 = vector.broadcast %4 : vector<8x1xf32> to vector<8x32xf32>
    %6 = arith.subf %0, %5 : vector<8x32xf32>
    %7 = arith.mulf %6, %6 : vector<8x32xf32>
    %cst_2 = arith.constant dense<0.000000e+00> : vector<8xf32>
    %8 = vector.multi_reduction <add>, %7, %cst_2 [1] : vector<8x32xf32> to vector<8xf32>
    %9 = vector.shape_cast %8 : vector<8xf32> to vector<8x1xf32>
    %cst_3 = arith.constant 3.200000e+01 : f32
    %10 = vector.broadcast %cst_3 : f32 to vector<8x1xf32>
    %11 = arith.divf %9, %10 : vector<8x1xf32>
    %cst_4 = arith.constant 9.99999974E-6 : f32
    %12 = vector.broadcast %cst_4 : f32 to vector<8x1xf32>
    %13 = arith.addf %11, %12 : vector<8x1xf32>
    %14 = math.rsqrt %13 : vector<8x1xf32>
    %15 = vector.broadcast %14 : vector<8x1xf32> to vector<8x32xf32>
    %16 = arith.mulf %6, %15 : vector<8x32xf32>
    %c0_5 = arith.constant 0 : index
    %c0_6 = arith.constant 0 : index
    %17 = vector.load %arg2[%c0_5, %c0_6] : memref<1x32xf32, #tpu.memory_space<vmem>>, vector<1x32xf32>
    %18 = vector.broadcast %17 : vector<1x32xf32> to vector<8x32xf32>
    %19 = arith.mulf %16, %18 : vector<8x32xf32>
    %c0_7 = arith.constant 0 : index
    %c0_8 = arith.constant 0 : index
    %20 = vector.load %arg3[%c0_7, %c0_8] : memref<1x32xf32, #tpu.memory_space<vmem>>, vector<1x32xf32>
    %21 = vector.broadcast %20 : vector<1x32xf32> to vector<8x32xf32>
    %22 = arith.addf %19, %21 : vector<8x32xf32>
    %c0_9 = arith.constant 0 : index
    %c0_10 = arith.constant 0 : index
    %23 = vector.load %arg4[%c0_9, %c0_10] : memref<32x32xf32, #tpu.memory_space<vmem>>, vector<32x32xf32>
    %cst_11 = arith.constant dense<0.000000e+00> : vector<8x32xf32>
    %24 = tpu.matmul %22, %23, %cst_11 {dimension_numbers = #tpu.dot_dimension_numbers<[1], [0], [0], [1], [0, 0, 1, 1], [], []>} : vector<8x32xf32>, vector<32x32xf32>, vector<8x32xf32> -> vector<8x32xf32>
    %c0_12 = arith.constant 0 : index
    %c0_13 = arith.constant 0 : index
    %25 = vector.load %arg5[%c0_12, %c0_13] : memref<1x32xf32, #tpu.memory_space<vmem>>, vector<1x32xf32>
    %26 = vector.broadcast %25 : vector<1x32xf32> to vector<8x32xf32>
    %27 = arith.addf %24, %26 : vector<8x32xf32>
    %c0_14 = arith.constant 0 : index
    %c0_15 = arith.constant 0 : index
    %28 = vector.load %arg6[%c0_14, %c0_15] : memref<8x32xf32, #tpu.memory_space<vmem>>, vector<8x32xf32>
    tpu.vector_store %arg6[%c0_14, %c0_15], %27 {strides = array<i32>} : memref<8x32xf32, #tpu.memory_space<vmem>>, vector<8x32xf32>,
    return
  }
  func.func @transform_0(%arg0: i32) -> (i32, i32) {
    %c0_i32 = arith.constant 0 : i32
    %c0_i32_0 = arith.constant 0 : i32
    return %arg0, %c0_i32 : i32, i32
  }
  func.func @transform_1(%arg0: i32) -> (i32, i32) {
    %c0_i32 = arith.constant 0 : i32
    %c0_i32_0 = arith.constant 0 : i32
    %c0_i32_1 = arith.constant 0 : i32
    return %c0_i32, %c0_i32_0 : i32, i32
  }
  func.func @transform_2(%arg0: i32) -> (i32, i32) {
    %c0_i32 = arith.constant 0 : i32
    %c0_i32_0 = arith.constant 0 : i32
    %c0_i32_1 = arith.constant 0 : i32
    return %c0_i32, %c0_i32_0 : i32, i32
  }
  func.func @transform_3(%arg0: i32) -> (i32, i32) {
    %c0_i32 = arith.constant 0 : i32
    %c0_i32_0 = arith.constant 0 : i32
    %c0_i32_1 = arith.constant 0 : i32
    return %c0_i32, %c0_i32_0 : i32, i32
  }
  func.func @transform_4(%arg0: i32) -> (i32, i32) {
    %c0_i32 = arith.constant 0 : i32
    %c0_i32_0 = arith.constant 0 : i32
    %c0_i32_1 = arith.constant 0 : i32
    return %c0_i32, %c0_i32_0 : i32, i32
  }
  func.func @transform_5(%arg0: i32) -> (i32, i32) {
    %c0_i32 = arith.constant 0 : i32
    %c0_i32_0 = arith.constant 0 : i32
    return %arg0, %c0_i32 : i32, i32
  }
}

</mosaic_0001>

<llo_original>
// kernel: tpu_custom_call.1
$region0: #{tpu_custom_call.1}
  #allocation0 [shape = 'u32[]', space=smem, size = 0x4, offset = 0x4, fixed_abs, tag = 'smem constant byte address 0x4 - core index']
  #allocation1 [shape = 'u32[72,128]{1,0:T(1,128)}', space=vmem, size = 0x9000, scoped, tag = 'internal scratch']
  %s0 = inlined_call_operand.hbm [shape: f32[16,32], index: 0, kind: input, shape index: {}]
  %s1 = inlined_call_operand.hbm [shape: f32[1,32], index: 1, kind: input, shape index: {}]
  %s2 = inlined_call_operand.vmem [shape: f32[1,32], index: 2, kind: input, shape index: {}]
  %s3 = inlined_call_operand.hbm [shape: f32[32,32], index: 3, kind: input, shape index: {}]
  %s4 = inlined_call_operand.vmem [shape: f32[1,32], index: 4, kind: input, shape index: {}]
  %s5 = inlined_call_operand.hbm [shape: f32[16,32], index: 5, kind: output, shape index: {}]
  %s6 = sld [smem:[#allocation0]]
  $region65: #{tpu_custom_call.1} parent=0
    _
  %s8 = ssub.s32 1, %s6
  %s9 = scalar_select 0, %s8, %s6
  $region1: #{tpu_custom_call.1} parent=0
    #allocation2 [shape = 'u8[8192]{0}', space=vmem, size = 0x2000, scoped, tag = 'input window, operand 0']
    #allocation3 [shape = 's32[2]{0}', space=sflag, size = 0x8, scoped, tag = 'scoped memory for tpu_custom_call.1']
    #allocation4 [shape = 's32[2]{0}', space=sflag, size = 0x8, scoped, tag = 'scoped memory for tpu_custom_call.1']
    #allocation5 [shape = 'u8[512]{0}', space=vmem, size = 0x400, scoped, tag = 'input window, operand 1, single buffered']
    #allocation6 [shape = 's32[1]{0}', space=sflag, size = 0x4, scoped, tag = 'scoped memory for tpu_custom_call.1']
    #allocation7 [shape = 'u8[16384]{0}', space=vmem, size = 0x4000, scoped, tag = 'input window, operand 3, single buffered']
    #allocation8 [shape = 'u8[8192]{0}', space=vmem, size = 0x2000, scoped, tag = 'output window, operand 0']
    %10 = vsyncpa [#allocation3], 0
    %s11 = scalar_lea.sflag [#allocation3], 1
    %12 = vsyncpa %s11, 0
    %13 = vsyncpa [#allocation6], 0
    %14 = vsyncpa [#allocation4], 0
    %s15 = scalar_lea.sflag [#allocation4], 1
    %16 = vsyncpa %s15, 0
    loop: start=0, step=1, limit=4
    $region2: #{tpu_custom_call.1} parent=1 // loop_pre_header
      _
    $region3: #{tpu_custom_call.1} parent=1 // loop_header
      %s18 = sphi 0, %s22
      %p19 = scmp.ge.s32.totalorder %s18, 4
      %s28 = sphi 0, %s30
      %s31 = sphi 0, %s28
      %s32 = sphi 0, %s31
      %s48 = sphi 0, %s32
      %s52 = sphi 0, %s52
      %s54 = sphi 0, %s52
      %s55 = sphi 0, %s54
      %s69 = sphi 0, %s55
      %s73 = sphi 0, %s73
      %s75 = sphi 0, %s73
      %s76 = sphi 0, %s75
      %s90 = sphi 0, %s76
      %s94 = sphi 0, %s94
      %s96 = sphi 0, %s94
      %s97 = sphi 0, %s96
      %s111 = sphi 0, %s97
      %s115 = sphi 0, %s115
      %s117 = sphi 0, %s115
      %s118 = sphi 0, %s117
      %s132 = sphi 0, %s118
      %s138 = sphi 0, %s140
      %s141 = sphi 0, %s138
      %s142 = sphi 0, %s141
      %s158 = sphi 0, %s142
    $region4: #{tpu_custom_call.1} parent=1 // loop_header_branch
      %21 = sbr.rel (%p19) target = $region8
    $region5: #{tpu_custom_call.1} parent=1 // loop_body
      %s23 = ssub.s32 %s18, 1
      %s24 = ssub.s32 %s18, 2
      %s25 = sadd.s32 %s18, 1
      %s26 = ssub.s32 %s18, %s25
      %p27 = scmp.eq.s32.totalorder %s26, 0
      %s29 = sadd.s32 %s28, 1
      %s30 = scalar_select %p27, %s28, %s29
      %p33 = pneg %p27
      %p34 = scmp.eq.s32.totalorder %s18, 1
      %p35 = por %p33, %p34
      %p36 = scmp.ne.s32.totalorder %s28, %s31
      %p37 = scmp.eq.s32.totalorder %s18, 0
      %p38 = por %p36, %p37
      %p39 = scmp.ne.s32.totalorder %s28, %s31
      %p40 = scmp.eq.s32.totalorder %s23, 1
      %p41 = por %p39, %p40
      %p42 = scmp.ne.s32.totalorder %s31, %s32
      %p43 = scmp.eq.s32.totalorder %s23, 0
      %p44 = por %p42, %p43
      %p45 = scmp.ne.s32.totalorder %s31, %s32
      %p46 = scmp.eq.s32.totalorder %s24, 1
      %p47 = por %p45, %p46
      %p49 = scmp.ne.s32.totalorder %s32, %s48
      %p50 = scmp.eq.s32.totalorder %s24, 0
      %p51 = por %p49, %p50
      %s53 = sadd.s32 %s52, 1
      %p56 = scmp.eq.s32.totalorder %s18, 1
      %p57 = scmp.ne.s32.totalorder %s52, %s54
      %p58 = scmp.eq.s32.totalorder %s18, 0
      %p59 = por %p57, %p58
      %p60 = scmp.ne.s32.totalorder %s52, %s54
      %p61 = scmp.eq.s32.totalorder %s23, 1
      %p62 = por %p60, %p61
      %p63 = scmp.ne.s32.totalorder %s54, %s55
      %p64 = scmp.eq.s32.totalorder %s23, 0
      %p65 = por %p63, %p64
      %p66 = scmp.ne.s32.totalorder %s54, %s55
      %p67 = scmp.eq.s32.totalorder %s24, 1
      %p68 = por %p66, %p67
      %p70 = scmp.ne.s32.totalorder %s55, %s69
      %p71 = scmp.eq.s32.totalorder %s24, 0
      %p72 = por %p70, %p71
      %s74 = sadd.s32 %s73, 1
      %p77 = scmp.eq.s32.totalorder %s18, 1
      %p78 = scmp.ne.s32.totalorder %s73, %s75
      %p79 = scmp.eq.s32.totalorder %s18, 0
      %p80 = por %p78, %p79
      %p81 = scmp.ne.s32.totalorder %s73, %s75
      %p82 = scmp.eq.s32.totalorder %s23, 1
      %p83 = por %p81, %p82
      %p84 = scmp.ne.s32.totalorder %s75, %s76
      %p85 = scmp.eq.s32.totalorder %s23, 0
      %p86 = por %p84, %p85
      %p87 = scmp.ne.s32.totalorder %s75, %s76
      %p88 = scmp.eq.s32.totalorder %s24, 1
      %p89 = por %p87, %p88
      %p91 = scmp.ne.s32.totalorder %s76, %s90
      %p92 = scmp.eq.s32.totalorder %s24, 0
      %p93 = por %p91, %p92
      %s95 = sadd.s32 %s94, 1
      %p98 = scmp.eq.s32.totalorder %s18, 1
      %p99 = scmp.ne.s32.totalorder %s94, %s96
      %p100 = scmp.eq.s32.totalorder %s18, 0
      %p101 = por %p99, %p100
      %p102 = scmp.ne.s32.totalorder %s94, %s96
      %p103 = scmp.eq.s32.totalorder %s23, 1
      %p104 = por %p102, %p103
      %p105 = scmp.ne.s32.totalorder %s96, %s97
      %p106 = scmp.eq.s32.totalorder %s23, 0
      %p107 = por %p105, %p106
      %p108 = scmp.ne.s32.totalorder %s96, %s97
      %p109 = scmp.eq.s32.totalorder %s24, 1
      %p110 = por %p108, %p109
      %p112 = scmp.ne.s32.totalorder %s97, %s111
      %p113 = scmp.eq.s32.totalorder %s24, 0
      %p114 = por %p112, %p113
      %s116 = sadd.s32 %s115, 1
      %p119 = scmp.eq.s32.totalorder %s18, 1
      %p120 = scmp.ne.s32.totalorder %s115, %s117
      %p121 = scmp.eq.s32.totalorder %s18, 0
      %p122 = por %p120, %p121
      %p123 = scmp.ne.s32.totalorder %s115, %s117
      %p124 = scmp.eq.s32.totalorder %s23, 1
      %p125 = por %p123, %p124
      %p126 = scmp.ne.s32.totalorder %s117, %s118
      %p127 = scmp.eq.s32.totalorder %s23, 0
      %p128 = por %p126, %p127
      %p129 = scmp.ne.s32.totalorder %s117, %s118
      %p130 = scmp.eq.s32.totalorder %s24, 1
      %p131 = por %p129, %p130
      %p133 = scmp.ne.s32.totalorder %s118, %s132
      %p134 = scmp.eq.s32.totalorder %s24, 0
      %p135 = por %p133, %p134
      %s136 = ssub.s32 %s18, %s25
      %p137 = scmp.eq.s32.totalorder %s136, 0
      %s139 = sadd.s32 %s138, 1
      %s140 = scalar_select %p137, %s138, %s139
      %p143 = pneg %p137
      %p144 = scmp.eq.s32.totalorder %s18, 1
      %p145 = por %p143, %p144
      %p146 = scmp.ne.s32.totalorder %s138, %s141
      %p147 = scmp.eq.s32.totalorder %s18, 0
      %p148 = por %p146, %p147
      %p149 = scmp.ne.s32.totalorder %s138, %s141
      %p150 = scmp.eq.s32.totalorder %s23, 1
      %p151 = por %p149, %p150
      %p152 = scmp.ne.s32.totalorder %s141, %s142
      %p153 = scmp.eq.s32.totalorder %s23, 0
      %p154 = por %p152, %p153
      %p155 = scmp.ne.s32.totalorder %s141, %s142
      %p156 = scmp.eq.s32.totalorder %s24, 1
      %p157 = por %p155, %p156
      %p159 = scmp.ne.s32.totalorder %s142, %s158
      %p160 = scmp.eq.s32.totalorder %s24, 0
      %p161 = por %p159, %p160
      %p162 = scmp.le.s32.totalorder 1, %s18
      %p163 = scmp.lt.s32.totalorder %s18, 3
      %p164 = pnand %p162, %p163
      %p165 = pneg %p164
      // Predicated region
      $region9: #{tpu_custom_call.1} parent=5 // pred_check
        _
      $region10: #{tpu_custom_call.1} parent=5 // pred_check_branch
        %167 = sbr.rel (%p164) target = $region12
      $region11: #{tpu_custom_call.1} parent=5 // pred_region
        %s168 = ssub.s32 %s18, 1
        // Predicated region
        $region13: #{tpu_custom_call.1} parent=11 // pred_check
          %p169 = pneg %p65
        $region14: #{tpu_custom_call.1} parent=11 // pred_check_branch
          %171 = sbr.rel (%p169) target = $region16
        $region15: #{tpu_custom_call.1} parent=11 // pred_region
          %173 = vsyncadd [#allocation6], 0
          %s175 = sshll.u32 %s1, 4
          %s176 = int_to_ptr.hbm [resolvable:$true] %s175
          %s177 = sshll.u32 [#allocation5], 4
          %s178 = int_to_ptr.vmem [resolvable:$true] %s177
          %180 = dma.hbm_to_vmem [thread:$0]  %s176, 16, %s178, [#allocation6]
        $region16: #{tpu_custom_call.1} parent=11 // pred_fallthru
          _
        // Predicated region
        $region17: #{tpu_custom_call.1} parent=11 // pred_check
          %p181 = pneg %p86
        $region18: #{tpu_custom_call.1} parent=11 // pred_check_branch
          %183 = sbr.rel (%p181) target = $region20
        $region19: #{tpu_custom_call.1} parent=11 // pred_region
          _
        $region20: #{tpu_custom_call.1} parent=11 // pred_fallthru
          _
        // Predicated region
        $region21: #{tpu_custom_call.1} parent=11 // pred_check
          %p184 = pneg %p107
        $region22: #{tpu_custom_call.1} parent=11 // pred_check_branch
          %186 = sbr.rel (%p184) target = $region24
        $region23: #{tpu_custom_call.1} parent=11 // pred_region
          %188 = vsyncadd [#allocation6], 0
          %s189 = sshll.u32 %s3, 4
          %s190 = int_to_ptr.hbm [resolvable:$true] %s189
          %s191 = sshll.u32 [#allocation7], 4
          %s192 = int_to_ptr.vmem [resolvable:$true] %s191
          %197 = dma.hbm_to_vmem [thread:$0]  %s190, 512, %s192, [#allocation6], 128, 128, 8
        $region24: #{tpu_custom_call.1} parent=11 // pred_fallthru
          _
        // Predicated region
        $region25: #{tpu_custom_call.1} parent=11 // pred_check
          %p198 = pneg %p128
        $region26: #{tpu_custom_call.1} parent=11 // pred_check_branch
          %200 = sbr.rel (%p198) target = $region28
        $region27: #{tpu_custom_call.1} parent=11 // pred_region
          _
        $region28: #{tpu_custom_call.1} parent=11 // pred_fallthru
          _
      $region12: #{tpu_custom_call.1} parent=5 // pred_fallthru
        _
      %p201 = scmp.lt.s32.totalorder %s18, 2
      // Predicated region
      $region29: #{tpu_custom_call.1} parent=5 // pred_check
        %p202 = pneg %p201
      $region30: #{tpu_custom_call.1} parent=5 // pred_check_branch
        %204 = sbr.rel (%p202) target = $region32
      $region31: #{tpu_custom_call.1} parent=5 // pred_region
        // Predicated region
        $region33: #{tpu_custom_call.1} parent=31 // pred_check
          %p205 = pneg %p38
        $region34: #{tpu_custom_call.1} parent=31 // pred_check_branch
          %207 = sbr.rel (%p205) target = $region36
        $region35: #{tpu_custom_call.1} parent=31 // pred_region
          %s208 = sand.u32 %s28, 1
          %s209 = scalar_lea.sflag [#allocation3], %s208
          %s210 = sand.u32 %s28, 1
          %s211 = smul.addr %s210, 8
          %s212 = scalar_lea.vmem [#allocation2], %s211
          %214 = vsyncadd %s209, 0
          %s215 = smul.addr %s18, 8
          %s216 = scalar_lea.hbm %s0, %s215
          %s218 = sshll.u32 %s216, 4
          %s219 = int_to_ptr.hbm [resolvable:$true] %s218
          %s220 = sshll.u32 %s212, 4
          %s221 = int_to_ptr.vmem [resolvable:$true] %s220
          %223 = dma.hbm_to_vmem [thread:$0]  %s219, 128, %s221, %s209
        $region36: #{tpu_custom_call.1} parent=31 // pred_fallthru
          _
      $region32: #{tpu_custom_call.1} parent=5 // pred_fallthru
        _
      %p224 = scmp.le.s32.totalorder 1, %s18
      %p225 = scmp.lt.s32.totalorder %s18, 3
      %p226 = pnand %p224, %p225
      %p227 = pneg %p226
      // Predicated region
      $region37: #{tpu_custom_call.1} parent=5 // pred_check
        _
      $region38: #{tpu_custom_call.1} parent=5 // pred_check_branch
        %229 = sbr.rel (%p226) target = $region40
      $region39: #{tpu_custom_call.1} parent=5 // pred_region
        %s230 = ssub.s32 %s18, 1
        %s231 = sand.u32 %s31, 1
        %s232 = scalar_lea.sflag [#allocation3], %s231
        %s233 = sand.u32 %s31, 1
        %s234 = smul.addr %s233, 8
        %s235 = scalar_lea.vmem [#allocation2], %s234
        // Predicated region
        $region41: #{tpu_custom_call.1} parent=39 // pred_check
          %p236 = pneg %p44
        $region42: #{tpu_custom_call.1} parent=39 // pred_check_branch
          %238 = sbr.rel (%p236) target = $region44
        $region43: #{tpu_custom_call.1} parent=39 // pred_region
          %240 = dma.done %s232, 128
        $region44: #{tpu_custom_call.1} parent=39 // pred_fallthru
          _
        // Predicated region
        $region45: #{tpu_custom_call.1} parent=39 // pred_check
          %p241 = pneg %p65
        $region46: #{tpu_custom_call.1} parent=39 // pred_check_branch
          %243 = sbr.rel (%p241) target = $region48
        $region47: #{tpu_custom_call.1} parent=39 // pred_region
          %245 = dma.done [#allocation6], 16
        $region48: #{tpu_custom_call.1} parent=39 // pred_fallthru
          _
        // Predicated region
        $region49: #{tpu_custom_call.1} parent=39 // pred_check
          %p246 = pneg %p107
        $region50: #{tpu_custom_call.1} parent=39 // pred_check_branch
          %248 = sbr.rel (%p246) target = $region52
        $region51: #{tpu_custom_call.1} parent=39 // pred_region
          %250 = dma.done [#allocation6], 512
        $region52: #{tpu_custom_call.1} parent=39 // pred_fallthru
          _
        %s251 = sand.u32 %s31, 1
        %s252 = scalar_lea.sflag [#allocation3], %s251
        %s253 = sand.u32 %s31, 1
        %s254 = smul.addr %s253, 8
        %s255 = scalar_lea.vmem [#allocation2], %s254
        %p256 = pneg %p44
        %p257 = pneg %p41
        %p258 = pneg %p65
        %p259 = pneg %p62
        %p260 = pneg %p86
        %p261 = pneg %p83
        %p262 = pneg %p107
        %p263 = pneg %p104
        %p264 = pneg %p128
        %p265 = pneg %p125
        %p266 = pneg %p154
        %p267 = pneg %p151
        %s268 = sand.u32 %s141, 1
        %s269 = scalar_lea.sflag [#allocation4], %s268
        %s270 = sand.u32 %s141, 1
        %s271 = smul.addr %s270, 8
        %s272 = scalar_lea.vmem [#allocation8], %s271
        %v273 = vld [vmem:[%s235] sm:$0xff]
        %vm274 = vcmask 261120
        %v275 = vsel %vm274, %v273, 0.0
        %276 = vadd.xlane.f32.xlu0 %v275
        %v277 = vpop.xlane.xlu0 %276
        %v278 = vrcp.pop 32.0
        %v279 = vmul.f32 32.0, %v278
        %v280 = vsub.f32 1.0, %v279
        %v281 = vmul.f32 %v278, %v280
        %v282 = vadd.f32 %v278, %v281
        %vm283 = vweird.f32 %v278
        %v284 = vsel %vm283, %v278, %v282
        %v285 = vmul.f32 %v277, %v284
        %v286 = vsub.f32 %v273, %v285
        %v287 = vmul.f32 %v286, %v286
        %v288 = vsel %vm274, %v287, 0.0
        %289 = vadd.xlane.f32.xlu0 %v288
        %v290 = vpop.xlane.xlu0 %289
        %v291 = vmul.f32 %v290, %v284
        %v292 = vadd.f32 %v291, 1e-05
        %v293 = vrsqrt.pop %v292
        %v294 = vmul.f32 %v293, %v292
        %v295 = vmul.f32 %v294, %v293
        %v296 = vmul.f32 0.5, %v295
        %v297 = vsub.f32 1.5, %v296
        %v298 = vmul.f32 %v293, %v297
        %vm299 = vweird.f32 %v292
        %vm300 = vweird.f32 %v293
        %vm301 = vmor %vm299, %vm300
        %v302 = vsel %vm301, %v293, %v298
        %v303 = vmul.f32 %v286, %v302
        %v304 = vld [vmem:[#allocation5] sm:$0x1]
        %v306 = vperm.slane %v304, 0
        %v308 = vmul.f32 %v303, %v306
        %v309 = vld [vmem:[%s2] sm:$0x1]
        %v311 = vperm.slane %v309, 0
        %v313 = vadd.f32 %v308, %v311
        %v314 = vld [vmem:[#allocation7] sm:$0xff]
        %v315 = vld [vmem:[#allocation7 + $0x8] sm:$0xff]
        %v316 = vld [vmem:[#allocation7 + $0x10] sm:$0xff]
        %v317 = vld [vmem:[#allocation7 + $0x18] sm:$0xff]
        %v318 = vld [vmem:[%s4] sm:$0x1]
        %v320 = vperm.slane %v318, 0
        %v323 = vsel %vm274, %v313, 0
        %325 = vmatpush.msra.mxu0 0.0
        %326 = vmatpush.msra.mxu0 0.0
        %327 = vmatpush.msra.mxu0 0.0
        %328 = vmatpush.msra.mxu0 0.0
        %329 = vmatpush.msra.mxu0 0.0
        %330 = vmatpush.msra.mxu0 0.0
        %331 = vmatpush.msra.mxu0 0.0
        %332 = vmatpush.msra.mxu0 0.0
        %333 = vmatpush.msra.mxu0 0.0
        %334 = vmatpush.msra.mxu0 0.0
        %335 = vmatpush.msra.mxu0 0.0
        %336 = vmatpush.msra.mxu0 0.0
        %337 = vmatpush.msra.mxu0 %v317
        %338 = vmatpush.msra.mxu0 %v316
        %339 = vmatpush.msra.mxu0 %v315
        %340 = vmatpush.msra.mxu0 %v314
        %341 = vmatmul.f32.gmra.mxu0 %v323
        %v342 = vpop.f32.mrf.mxu0
        %v343 = vadd.f32 %v320, %v342
        %344 = vdwg.mxu0
        %345 = vst.msk [vmem:[%s272] sm:$0xff] %vm274, %v343
        %s346 = sand.u32 %s141, 1
        %s347 = scalar_lea.sflag [#allocation4], %s346
        %s348 = sand.u32 %s141, 1
        %s349 = smul.addr %s348, 8
        %s350 = scalar_lea.vmem [#allocation8], %s349
        // Predicated region
        $region53: #{tpu_custom_call.1} parent=39 // pred_check
          %p351 = pneg %p151
        $region54: #{tpu_custom_call.1} parent=39 // pred_check_branch
          %353 = sbr.rel (%p351) target = $region56
        $region55: #{tpu_custom_call.1} parent=39 // pred_region
          %355 = vsyncadd %s347, 0
          %s356 = smul.addr %s23, 8
          %s357 = scalar_lea.hbm %s5, %s356
          %s359 = sshll.u32 %s350, 4
          %s360 = int_to_ptr.vmem [resolvable:$true] %s359
          %s361 = sshll.u32 %s357, 4
          %s362 = int_to_ptr.hbm [resolvable:$true] %s361
          %364 = dma.vmem_to_hbm [thread:$0]  %s360, 128, %s362, %s347
        $region56: #{tpu_custom_call.1} parent=39 // pred_fallthru
          _
      $region40: #{tpu_custom_call.1} parent=5 // pred_fallthru
        _
      %p365 = scmp.le.s32.totalorder 2, %s18
      // Predicated region
      $region57: #{tpu_custom_call.1} parent=5 // pred_check
        %p366 = pneg %p365
      $region58: #{tpu_custom_call.1} parent=5 // pred_check_branch
        %368 = sbr.rel (%p366) target = $region60
      $region59: #{tpu_custom_call.1} parent=5 // pred_region
        %s369 = ssub.s32 %s18, 2
        // Predicated region
        $region61: #{tpu_custom_call.1} parent=59 // pred_check
          %p370 = pneg %p157
        $region62: #{tpu_custom_call.1} parent=59 // pred_check_branch
          %372 = sbr.rel (%p370) target = $region64
        $region63: #{tpu_custom_call.1} parent=59 // pred_region
          %s373 = sand.u32 %s142, 1
          %s374 = scalar_lea.sflag [#allocation4], %s373
          %s375 = sand.u32 %s142, 1
          %s376 = smul.addr %s375, 8
          %s377 = scalar_lea.vmem [#allocation8], %s376
          %379 = dma.done %s374, 128
        $region64: #{tpu_custom_call.1} parent=59 // pred_fallthru
          _
      $region60: #{tpu_custom_call.1} parent=5 // pred_fallthru
        _
    $region6: #{tpu_custom_call.1} parent=1 // loop_footer
      %s22 = sadd.s32 1, %s18
    $region7: #{tpu_custom_call.1} parent=1 // loop_footer_branch
      %17 = sbr.rel target = $region3
    $region8: #{tpu_custom_call.1} parent=1 // loop_exit
      _
    %380 = vsyncpa [#allocation3], 1
    %s381 = scalar_lea.sflag [#allocation3], 1
    %382 = vsyncpa %s381, 1
    %383 = vsyncpa [#allocation6], 1
    %384 = vsyncpa [#allocation4], 1
    %s385 = scalar_lea.sflag [#allocation4], 1
    %386 = vsyncpa %s385, 1

</llo_original>
